<compile_context>
chip_gen: v5e
topology: v5e:2x2
jax: 0.10.0
libtpu: 0.0.40
codegen_flags: <defaults>
</compile_context>

<pallas_src>
import functools

import jax
import jax.numpy as jnp
from jax.experimental import pallas as pl
from jax.experimental.pallas import tpu as pltpu

NUM_CLASSES = 14


def _head_softmax_kernel(x_ref, wt_ref, b_ref, o_ref):
    """Fused 1x1-conv head + channel softmax (class-major, pixels on lanes).

    x_ref : (1, C, T)            input pixels, T on the 128-lane axis
    wt_ref: (NUM_CLASSES, C)     head weight, transposed
    b_ref : (NUM_CLASSES, 1)     head bias
    o_ref : (1, NUM_CLASSES, T)  per-pixel class probabilities (class-major)
    """
    c_in = x_ref.shape[1]
    wt = wt_ref[...]                                   # (K, C), tiny

    if c_in <= 8:
        # Tiny channel count: 1x1 conv as unrolled VPU FMAs; MXU not involved.
        logits = b_ref[...] + wt[:, 0:1] * x_ref[0, 0:1, :]      # (K, T)
        for c in range(1, c_in):
            logits = logits + wt[:, c:c + 1] * x_ref[0, c:c + 1, :]
    else:
        # Real backbone-feature head (C_in ~ 64-512): MXU with lane-dense N=T.
        logits = jnp.dot(wt, x_ref[0],
                         preferred_element_type=jnp.float32) + b_ref[...]

    # Softmax over the class (sublane) axis; all elementwise work is lane-dense.
    m = jnp.max(logits, axis=0, keepdims=True)         # (1, T)
    e = jnp.exp(logits - m)                            # (K, T)
    denom = jnp.sum(e, axis=0, keepdims=True)          # (1, T)
    # approx=False keeps rows summing to 1 within 1e-5 (exact reciprocal).
    o_ref[0] = (e * pl.reciprocal(denom, approx=False)).astype(o_ref.dtype)


def _round_up(x, m):
    return ((x + m - 1) // m) * m


@functools.partial(jax.jit, static_argnames=("tile_hw", "out_dtype"))
def model_forward(x_nchw, w, b, *, tile_hw=8192, out_dtype=jnp.float32):
    """x_nchw: (N, C, H, W) f32; w: (C, 14); b: (14,) -> (N, H, W, 14).

    out_dtype=jnp.bfloat16 halves the dominant output HBM traffic if the
    consumer tolerates it (compute stays f32; cast only at the store).
    """
    n, c, h, wdim = x_nchw.shape
    hw = h * wdim

    # Free reshape: NCHW -> (N, C, H*W).  No input transpose in the wrapper.
    x_flat = x_nchw.reshape(n, c, hw)

    # Pixel tile on the lane axis: multiple of 128, big (sweep 2048-8192),
    # ragged H*W handled by padding the last tile instead of asserting.
    tile = max(128, min(tile_hw, _round_up(hw, 128)))
    tile = (tile // 128) * 128
    hw_pad = _round_up(hw, tile)
    if hw_pad != hw:
        x_flat = jnp.pad(x_flat, ((0, 0), (0, 0), (0, hw_pad - hw)))

    wt = jnp.transpose(w, (1, 0))                       # (14, C), tiny
    b2 = b.reshape(NUM_CLASSES, 1)

    grid = (n, hw_pad // tile)

    out = pl.pallas_call(
        _head_softmax_kernel,
        out_shape=jax.ShapeDtypeStruct((n, NUM_CLASSES, hw_pad), out_dtype),
        grid_spec=pltpu.PrefetchScalarGridSpec(
            num_scalar_prefetch=0,
            grid=grid,
            in_specs=[
                pl.BlockSpec((1, c, tile), lambda i, j: (i, 0, j)),
                pl.BlockSpec((NUM_CLASSES, c), lambda i, j: (0, 0)),
                pl.BlockSpec((NUM_CLASSES, 1), lambda i, j: (0, 0)),
            ],
            out_specs=pl.BlockSpec((1, NUM_CLASSES, tile),
                                   lambda i, j: (i, 0, j)),
        ),
        # Both grid axes independent -> shard across v7x's two TensorCores.
        # VMEM footprint at tile=8192 is ~1 MiB double-buffered, so no
        # vmem_limit_bytes override is needed (raise it only for tiles >=16K).
        compiler_params=pltpu.CompilerParams(
            dimension_semantics=("parallel", "parallel")),
    )(x_flat, wt, b2)

    out = out[:, :, :hw]
    # permute(0, 2, 3, 1): class-major -> NHWC relayout done once in the
    # wrapper (keeps in-kernel stores lane-dense / unmasked).
    return jnp.transpose(out, (0, 2, 1)).reshape(n, h, wdim, NUM_CLASSES)


def reference_forward(x_nchw, w, b):
    logits = jnp.einsum("nchw,ck->nhwk", x_nchw, w) + b[None, None, None, :]
    return jax.nn.softmax(logits, axis=-1)


if __name__ == "__main__":
    # TODO(synk): the resnet18-backbone `generate_model` body is external /
    # checkpoint-defined and is not reproduced; only the classifier head +
    # permute + softmax hot path is implemented in Pallas.
    key = jax.random.PRNGKey(0)
    kx, kw, kb = jax.random.split(key, 3)

    N, C_IN, H, W = 2, 3, 16, 16          # small shapes; H*W = 256
    x = jax.random.normal(kx, (N, C_IN, H, W), dtype=jnp.float32)
    w = jax.random.normal(kw, (C_IN, NUM_CLASSES), dtype=jnp.float32) * 0.1
    b = jax.random.normal(kb, (NUM_CLASSES,), dtype=jnp.float32) * 0.1

    y = jax.block_until_ready(model_forward(x, w, b))

    y_ref = reference_forward(x, w, b)
    assert y.shape == (N, H, W, NUM_CLASSES)
    assert jnp.allclose(y, y_ref, atol=1e-5, rtol=1e-5)
    assert jnp.allclose(jnp.sum(y, axis=-1), 1.0, atol=1e-5)

    print("KERNEL_OK")
</pallas_src>

<mosaic_0001>
module attributes {stable_mosaic.version = 11 : i64} {
  func.func @_head_softmax_kernel(%arg0: i32, %arg1: i32, %arg2: memref<1x3x256xf32, #tpu.memory_space<vmem>>, %arg3: memref<14x3xf32, #tpu.memory_space<vmem>>, %arg4: memref<14x1xf32, #tpu.memory_space<vmem>>, %arg5: memref<1x14x256xf32, #tpu.memory_space<vmem>>) attributes {dimension_semantics = [#tpu.dimension_semantics<parallel>, #tpu.dimension_semantics<parallel>], iteration_bounds = array<i64: 2, 1>, scalar_prefetch = 0 : i64, scratch_operands = 0 : i64, tpu.core_type = #tpu.core_type<tc>, window_params = [{transform_indices = @transform_0, window_bounds = array<i64: 1, 3, 256>}, {pipeline_mode = #tpu.pipeline_mode<synchronous>, transform_indices = @transform_1, window_bounds = array<i64: 14, 3>}, {pipeline_mode = #tpu.pipeline_mode<synchronous>, transform_indices = @transform_2, window_bounds = array<i64: 14, 1>}, {transform_indices = @transform_3, window_bounds = array<i64: 1, 14, 256>}]} {
    %c0 = arith.constant 0 : index
    %c0_0 = arith.constant 0 : index
    %0 = vector.load %arg3[%c0, %c0_0] : memref<14x3xf32, #tpu.memory_space<vmem>>, vector<14x3xf32>
    %c0_1 = arith.constant 0 : index
    %c0_2 = arith.constant 0 : index
    %1 = vector.load %arg4[%c0_1, %c0_2] : memref<14x1xf32, #tpu.memory_space<vmem>>, vector<14x1xf32>
    %2 = vector.extract_strided_slice %0 {offsets = [0, 0], sizes = [14, 1], strides = [1, 1]} : vector<14x3xf32> to vector<14x1xf32>
    %c0_3 = arith.constant 0 : index
    %c0_4 = arith.constant 0 : index
    %c0_5 = arith.constant 0 : index
    %3 = vector.load %arg2[%c0_3, %c0_4, %c0_5] : memref<1x3x256xf32, #tpu.memory_space<vmem>>, vector<1x1x256xf32>
    %4 = vector.shape_cast %3 : vector<1x1x256xf32> to vector<1x256xf32>
    %5 = vector.broadcast %2 : vector<14x1xf32> to vector<14x256xf32>
    %6 = vector.broadcast %4 : vector<1x256xf32> to vector<14x256xf32>
    %7 = arith.mulf %5, %6 : vector<14x256xf32>
    %8 = vector.broadcast %1 : vector<14x1xf32> to vector<14x256xf32>
    %9 = arith.addf %8, %7 : vector<14x256xf32>
    %10 = vector.extract_strided_slice %0 {offsets = [0, 1], sizes = [14, 1], strides = [1, 1]} : vector<14x3xf32> to vector<14x1xf32>
    %c0_6 = arith.constant 0 : index
    %c1 = arith.constant 1 : index
    %c0_7 = arith.constant 0 : index
    %11 = vector.load %arg2[%c0_6, %c1, %c0_7] : memref<1x3x256xf32, #tpu.memory_space<vmem>>, vector<1x1x256xf32>
    %12 = vector.shape_cast %11 : vector<1x1x256xf32> to vector<1x256xf32>
    %13 = vector.broadcast %10 : vector<14x1xf32> to vector<14x256xf32>
    %14 = vector.broadcast %12 : vector<1x256xf32> to vector<14x256xf32>
    %15 = arith.mulf %13, %14 : vector<14x256xf32>
    %16 = arith.addf %9, %15 : vector<14x256xf32>
    %17 = vector.extract_strided_slice %0 {offsets = [0, 2], sizes = [14, 1], strides = [1, 1]} : vector<14x3xf32> to vector<14x1xf32>
    %c0_8 = arith.constant 0 : index
    %c2 = arith.constant 2 : index
    %c0_9 = arith.constant 0 : index
    %18 = vector.load %arg2[%c0_8, %c2, %c0_9] : memref<1x3x256xf32, #tpu.memory_space<vmem>>, vector<1x1x256xf32>
    %19 = vector.shape_cast %18 : vector<1x1x256xf32> to vector<1x256xf32>
    %20 = vector.broadcast %17 : vector<14x1xf32> to vector<14x256xf32>
    %21 = vector.broadcast %19 : vector<1x256xf32> to vector<14x256xf32>
    %22 = arith.mulf %20, %21 : vector<14x256xf32>
    %23 = arith.addf %16, %22 : vector<14x256xf32>
    %cst = arith.constant dense<0xFF800000> : vector<256xf32>
    %24 = vector.multi_reduction <maximumf>, %23, %cst [0] : vector<14x256xf32> to vector<256xf32>
    %25 = vector.shape_cast %24 : vector<256xf32> to vector<1x256xf32>
    %26 = vector.broadcast %25 : vector<1x256xf32> to vector<14x256xf32>
    %27 = arith.subf %23, %26 : vector<14x256xf32>
    %28 = math.exp %27 : vector<14x256xf32>
    %cst_10 = arith.constant dense<0.000000e+00> : vector<256xf32>
    %29 = vector.multi_reduction <add>, %28, %cst_10 [0] : vector<14x256xf32> to vector<256xf32>
    %30 = vector.shape_cast %29 : vector<256xf32> to vector<1x256xf32>
    %31 = tpu.reciprocal %30 : vector<1x256xf32> -> vector<1x256xf32>
    %32 = vector.broadcast %31 : vector<1x256xf32> to vector<14x256xf32>
    %33 = arith.mulf %28, %32 : vector<14x256xf32>
    %c0_11 = arith.constant 0 : index
    %c0_12 = arith.constant 0 : index
    %c0_13 = arith.constant 0 : index
    %34 = vector.load %arg5[%c0_11, %c0_12, %c0_13] : memref<1x14x256xf32, #tpu.memory_space<vmem>>, vector<1x14x256xf32>
    %35 = vector.shape_cast %34 : vector<1x14x256xf32> to vector<14x256xf32>
    %36 = vector.shape_cast %33 : vector<14x256xf32> to vector<1x14x256xf32>
    tpu.vector_store %arg5[%c0_11, %c0_12, %c0_13], %36 {strides = array<i32>} : memref<1x14x256xf32, #tpu.memory_space<vmem>>, vector<1x14x256xf32>,
    return
  }
  func.func @transform_0(%arg0: i32, %arg1: i32) -> (i32, i32, i32) {
    %c0_i32 = arith.constant 0 : i32
    %c0_i32_0 = arith.constant 0 : i32
    return %arg0, %c0_i32, %arg1 : i32, i32, i32
  }
  func.func @transform_1(%arg0: i32, %arg1: i32) -> (i32, i32) {
    %c0_i32 = arith.constant 0 : i32
    %c0_i32_0 = arith.constant 0 : i32
    %c0_i32_1 = arith.constant 0 : i32
    return %c0_i32, %c0_i32_0 : i32, i32
  }
  func.func @transform_2(%arg0: i32, %arg1: i32) -> (i32, i32) {
    %c0_i32 = arith.constant 0 : i32
    %c0_i32_0 = arith.constant 0 : i32
    %c0_i32_1 = arith.constant 0 : i32
    return %c0_i32, %c0_i32_0 : i32, i32
  }
  func.func @transform_3(%arg0: i32, %arg1: i32) -> (i32, i32, i32) {
    %c0_i32 = arith.constant 0 : i32
    %c0_i32_0 = arith.constant 0 : i32
    return %arg0, %c0_i32, %arg1 : i32, i32, i32
  }
}

</mosaic_0001>

<llo_original>
// kernel: model_forward.1
$region0: #{model_forward.1}
  #allocation0 [shape = 'u32[]', space=smem, size = 0x4, offset = 0x4, fixed_abs, tag = 'smem constant byte address 0x4 - core index']
  #allocation1 [shape = 'u32[72,128]{1,0:T(1,128)}', space=vmem, size = 0x9000, scoped, tag = 'internal scratch']
  %s0 = inlined_call_operand.vmem [shape: f32[2,3,256], index: 0, kind: input, shape index: {}]
  %s1 = inlined_call_operand.vmem [shape: f32[14,3], index: 1, kind: input, shape index: {}]
  %s2 = inlined_call_operand.vmem [shape: f32[14,1], index: 2, kind: input, shape index: {}]
  %s3 = inlined_call_operand.vmem [shape: f32[2,14,256], index: 3, kind: output, shape index: {}]
  %s4 = sld [smem:[#allocation0]]
  $region45: #{model_forward.1} parent=0
    _
  %s6 = ssub.s32 1, %s4
  %s7 = scalar_select 0, %s6, %s4
  loop: start=0, step=1, limit=4
  $region2: #{model_forward.1} parent=0 // loop_pre_header
    _
  $region3: #{model_forward.1} parent=0 // loop_header
    %s9 = sphi 0, %s13
    %p10 = scmp.ge.s32.totalorder %s9, 4
    %s16 = sphi 0, %s28
    %s17 = sphi 0, %s24
    %s18 = sphi 0, %s16
    %s19 = sphi 0, %s17
    %s20 = sphi 0, %s18
    %s21 = sphi 0, %s19
    %s33 = sphi 0, %s35
    %s36 = sphi 0, %s33
    %s37 = sphi 0, %s36
    %s53 = sphi 0, %s37
    %s57 = sphi 0, %s57
    %s59 = sphi 0, %s57
    %s60 = sphi 0, %s59
    %s74 = sphi 0, %s60
    %s78 = sphi 0, %s78
    %s80 = sphi 0, %s78
    %s81 = sphi 0, %s80
    %s95 = sphi 0, %s81
    %s103 = sphi 0, %s105
    %s106 = sphi 0, %s103
    %s107 = sphi 0, %s106
    %s123 = sphi 0, %s107
  $region4: #{model_forward.1} parent=0 // loop_header_branch
    %12 = sbr.rel (%p10) target = $region8
  $region5: #{model_forward.1} parent=0 // loop_body
    %s14 = ssub.s32 %s9, 1
    %s15 = ssub.s32 %s9, 2
    %s22 = sadd.s32 1, %s17
    %p23 = scmp.ge.s32.totalorder %s22, 1
    %s24 = scalar_select %p23, 0, %s22
    %s25 = sadd.s32 1, %s16
    %s26 = scalar_select %p23, %s25, %s16
    %p27 = scmp.ge.s32.totalorder %s26, 2
    %s28 = scalar_select %p27, 0, %s26
    %s29 = ssub.s32 %s16, %s28
    %s30 = ssub.s32 %s17, %s24
    %s31 = sor.u32 %s29, %s30
    %p32 = scmp.eq.s32.totalorder %s31, 0
    %s34 = sadd.s32 %s33, 1
    %s35 = scalar_select %p32, %s33, %s34
    %p38 = pneg %p32
    %p39 = scmp.eq.s32.totalorder %s9, 1
    %p40 = por %p38, %p39
    %p41 = scmp.ne.s32.totalorder %s33, %s36
    %p42 = scmp.eq.s32.totalorder %s9, 0
    %p43 = por %p41, %p42
    %p44 = scmp.ne.s32.totalorder %s33, %s36
    %p45 = scmp.eq.s32.totalorder %s14, 1
    %p46 = por %p44, %p45
    %p47 = scmp.ne.s32.totalorder %s36, %s37
    %p48 = scmp.eq.s32.totalorder %s14, 0
    %p49 = por %p47, %p48
    %p50 = scmp.ne.s32.totalorder %s36, %s37
    %p51 = scmp.eq.s32.totalorder %s15, 1
    %p52 = por %p50, %p51
    %p54 = scmp.ne.s32.totalorder %s37, %s53
    %p55 = scmp.eq.s32.totalorder %s15, 0
    %p56 = por %p54, %p55
    %s58 = sadd.s32 %s57, 1
    %p61 = scmp.eq.s32.totalorder %s9, 1
    %p62 = scmp.ne.s32.totalorder %s57, %s59
    %p63 = scmp.eq.s32.totalorder %s9, 0
    %p64 = por %p62, %p63
    %p65 = scmp.ne.s32.totalorder %s57, %s59
    %p66 = scmp.eq.s32.totalorder %s14, 1
    %p67 = por %p65, %p66
    %p68 = scmp.ne.s32.totalorder %s59, %s60
    %p69 = scmp.eq.s32.totalorder %s14, 0
    %p70 = por %p68, %p69
    %p71 = scmp.ne.s32.totalorder %s59, %s60
    %p72 = scmp.eq.s32.totalorder %s15, 1
    %p73 = por %p71, %p72
    %p75 = scmp.ne.s32.totalorder %s60, %s74
    %p76 = scmp.eq.s32.totalorder %s15, 0
    %p77 = por %p75, %p76
    %s79 = sadd.s32 %s78, 1
    %p82 = scmp.eq.s32.totalorder %s9, 1
    %p83 = scmp.ne.s32.totalorder %s78, %s80
    %p84 = scmp.eq.s32.totalorder %s9, 0
    %p85 = por %p83, %p84
    %p86 = scmp.ne.s32.totalorder %s78, %s80
    %p87 = scmp.eq.s32.totalorder %s14, 1
    %p88 = por %p86, %p87
    %p89 = scmp.ne.s32.totalorder %s80, %s81
    %p90 = scmp.eq.s32.totalorder %s14, 0
    %p91 = por %p89, %p90
    %p92 = scmp.ne.s32.totalorder %s80, %s81
    %p93 = scmp.eq.s32.totalorder %s15, 1
    %p94 = por %p92, %p93
    %p96 = scmp.ne.s32.totalorder %s81, %s95
    %p97 = scmp.eq.s32.totalorder %s15, 0
    %p98 = por %p96, %p97
    %s99 = ssub.s32 %s16, %s28
    %s100 = ssub.s32 %s17, %s24
    %s101 = sor.u32 %s99, %s100
    %p102 = scmp.eq.s32.totalorder %s101, 0
    %s104 = sadd.s32 %s103, 1
    %s105 = scalar_select %p102, %s103, %s104
    %p108 = pneg %p102
    %p109 = scmp.eq.s32.totalorder %s9, 1
    %p110 = por %p108, %p109
    %p111 = scmp.ne.s32.totalorder %s103, %s106
    %p112 = scmp.eq.s32.totalorder %s9, 0
    %p113 = por %p111, %p112
    %p114 = scmp.ne.s32.totalorder %s103, %s106
    %p115 = scmp.eq.s32.totalorder %s14, 1
    %p116 = por %p114, %p115
    %p117 = scmp.ne.s32.totalorder %s106, %s107
    %p118 = scmp.eq.s32.totalorder %s14, 0
    %p119 = por %p117, %p118
    %p120 = scmp.ne.s32.totalorder %s106, %s107
    %p121 = scmp.eq.s32.totalorder %s15, 1
    %p122 = por %p120, %p121
    %p124 = scmp.ne.s32.totalorder %s107, %s123
    %p125 = scmp.eq.s32.totalorder %s15, 0
    %p126 = por %p124, %p125
    %p127 = scmp.le.s32.totalorder 1, %s9
    %p128 = scmp.lt.s32.totalorder %s9, 3
    %p129 = pnand %p127, %p128
    %p130 = pneg %p129
    // Predicated region
    $region9: #{model_forward.1} parent=5 // pred_check
      _
    $region10: #{model_forward.1} parent=5 // pred_check_branch
      %132 = sbr.rel (%p129) target = $region12
    $region11: #{model_forward.1} parent=5 // pred_region
      %s133 = ssub.s32 %s9, 1
      // Predicated region
      $region13: #{model_forward.1} parent=11 // pred_check
        %p134 = pneg %p70
      $region14: #{model_forward.1} parent=11 // pred_check_branch
        %136 = sbr.rel (%p134) target = $region16
      $region15: #{model_forward.1} parent=11 // pred_region
        _
      $region16: #{model_forward.1} parent=11 // pred_fallthru
        _
      // Predicated region
      $region17: #{model_forward.1} parent=11 // pred_check
        %p137 = pneg %p91
      $region18: #{model_forward.1} parent=11 // pred_check_branch
        %139 = sbr.rel (%p137) target = $region20
      $region19: #{model_forward.1} parent=11 // pred_region
        _
      $region20: #{model_forward.1} parent=11 // pred_fallthru
        _
    $region12: #{model_forward.1} parent=5 // pred_fallthru
      _
    %p140 = scmp.lt.s32.totalorder %s9, 2
    // Predicated region
    $region21: #{model_forward.1} parent=5 // pred_check
      %p141 = pneg %p140
    $region22: #{model_forward.1} parent=5 // pred_check_branch
      %143 = sbr.rel (%p141) target = $region24
    $region23: #{model_forward.1} parent=5 // pred_region
      // Predicated region
      $region25: #{model_forward.1} parent=23 // pred_check
        %p144 = pneg %p43
      $region26: #{model_forward.1} parent=23 // pred_check_branch
        %146 = sbr.rel (%p144) target = $region28
      $region27: #{model_forward.1} parent=23 // pred_region
        %s147 = smul.u32 2, %s17
        %p148 = scmp.lt.s32.totalorder %s16, 1
        %s149 = scalar_select %p148, %s16, 1
        %p150 = scmp.lt.s32.totalorder %s147, 1
        %s151 = scalar_select %p150, %s147, 1
        %s152 = smul.addr %s149, 2
        %s153 = sadd.s32 %s151, %s152
        %s154 = smul.addr %s153, 4
        %s155 = scalar_lea.vmem %s0, %s154
        %s156 = smul.u32 2, %s17
      $region28: #{model_forward.1} parent=23 // pred_fallthru
        _
    $region24: #{model_forward.1} parent=5 // pred_fallthru
      _
    %p157 = scmp.le.s32.totalorder 1, %s9
    %p158 = scmp.lt.s32.totalorder %s9, 3
    %p159 = pnand %p157, %p158
    %p160 = pneg %p159
    // Predicated region
    $region29: #{model_forward.1} parent=5 // pred_check
      _
    $region30: #{model_forward.1} parent=5 // pred_check_branch
      %162 = sbr.rel (%p159) target = $region32
    $region31: #{model_forward.1} parent=5 // pred_region
      %s163 = ssub.s32 %s9, 1
      %s164 = smul.u32 2, %s19
      %p165 = scmp.lt.s32.totalorder %s18, 1
      %s166 = scalar_select %p165, %s18, 1
      %p167 = scmp.lt.s32.totalorder %s164, 1
      %s168 = scalar_select %p167, %s164, 1
      %s169 = smul.addr %s166, 2
      %s170 = sadd.s32 %s168, %s169
      %s171 = smul.addr %s170, 4
      %s172 = scalar_lea.vmem %s0, %s171
      %p173 = pneg %p49
      %p174 = pneg %p46
      %p175 = pneg %p70
      %p176 = pneg %p67
      %p177 = pneg %p91
      %p178 = pneg %p88
      %p179 = pneg %p119
      %p180 = pneg %p116
      %s181 = smul.u32 2, %s19
      %p182 = scmp.lt.s32.totalorder %s18, 1
      %s183 = scalar_select %p182, %s18, 1
      %p184 = scmp.lt.s32.totalorder %s181, 1
      %s185 = scalar_select %p184, %s181, 1
      %s186 = smul.addr %s183, 4
      %s187 = sadd.s32 %s185, %s186
      %s188 = smul.addr %s187, 8
      %s189 = scalar_lea.vmem %s3, %s188
      %s190 = smul.u32 2, %s19
      %p191 = scmp.lt.s32.totalorder %s18, 1
      %s192 = scalar_select %p191, %s18, 1
      %p193 = scmp.lt.s32.totalorder %s190, 1
      %s194 = scalar_select %p193, %s190, 1
      %s195 = smul.addr %s192, 2
      %s196 = sadd.s32 %s194, %s195
      %s197 = smul.addr %s196, 4
      %s198 = scalar_lea.vmem %s0, %s197
      %s199 = smul.u32 2, %s19
      %s200 = smul.u32 2, %s19
      %p201 = scmp.lt.s32.totalorder %s18, 1
      %s202 = scalar_select %p201, %s18, 1
      %p203 = scmp.lt.s32.totalorder %s200, 1
      %s204 = scalar_select %p203, %s200, 1
      %s205 = smul.addr %s202, 4
      %s206 = sadd.s32 %s204, %s205
      %s207 = smul.addr %s206, 8
      %s208 = scalar_lea.vmem %s3, %s207
      %s209 = smul.u32 2, %s19
      %v210 = vld [vmem:[%s1] sm:$0xff]
      %v211 = vld [vmem:[%s1 + $0x8] sm:$0x3f]
      %v212 = vld [vmem:[%s2] sm:$0xff]
      %v213 = vld [vmem:[%s2 + $0x8] sm:$0x3f]
      %v214 = vld [vmem:[%s198] ss:$4 sm:$0x3]
      %216 = vset.pattern.permute.xlu0 0
      %217 = vperm.xlu0 %216, %v210
      %v218 = vpop.permute.xlu0 %217
      %221 = vset.pattern.permute.xlu0 0
      %222 = vperm.xlu0 %221, %v211
      %v223 = vpop.permute.xlu0 %222
      %v226 = vperm.slane %v214, 0
      %v227 = vperm.slane %v214, 1
      %v230 = vmul.f32 %v218, %v226
      %v231 = vmul.f32 %v218, %v227
      %v232 = vmul.f32 %v223, %v226
      %v233 = vmul.f32 %v223, %v227
      %235 = vset.pattern.permute.xlu0 0
      %236 = vperm.xlu0 %235, %v212
      %v237 = vpop.permute.xlu0 %236
      %240 = vset.pattern.permute.xlu0 0
      %241 = vperm.xlu0 %240, %v213
      %v242 = vpop.permute.xlu0 %241
      %v244 = vadd.f32 %v237, %v230
      %v245 = vadd.f32 %v237, %v231
      %v246 = vadd.f32 %v242, %v232
      %v247 = vadd.f32 %v242, %v233
      %s248 = scalar_lea.vmem %s198, 1
      %v249 = vld [vmem:[%s248] ss:$4 sm:$0x3]
      %250 = vset.pattern.permute.xlu0 1
      %251 = vperm.xlu0 %250, %v210
      %v252 = vpop.permute.xlu0 %251
      %254 = vset.pattern.permute.xlu0 1
      %255 = vperm.xlu0 %254, %v211
      %v256 = vpop.permute.xlu0 %255
      %v259 = vperm.slane %v249, 0
      %v260 = vperm.slane %v249, 1
      %v263 = vmul.f32 %v252, %v259
      %v264 = vmul.f32 %v252, %v260
      %v265 = vmul.f32 %v256, %v259
      %v266 = vmul.f32 %v256, %v260
      %v267 = vadd.f32 %v244, %v263
      %v268 = vadd.f32 %v245, %v264
      %v269 = vadd.f32 %v246, %v265
      %v270 = vadd.f32 %v247, %v266
      %s271 = scalar_lea.vmem %s198, 2
      %v272 = vld [vmem:[%s271] ss:$4 sm:$0x3]
      %273 = vset.pattern.permute.xlu0 2
      %274 = vperm.xlu0 %273, %v210
      %v275 = vpop.permute.xlu0 %274
      %277 = vset.pattern.permute.xlu0 2
      %278 = vperm.xlu0 %277, %v211
      %v279 = vpop.permute.xlu0 %278
      %v282 = vperm.slane %v272, 0
      %v283 = vperm.slane %v272, 1
      %v286 = vmul.f32 %v275, %v282
      %v287 = vmul.f32 %v275, %v283
      %v288 = vmul.f32 %v279, %v282
      %v289 = vmul.f32 %v279, %v283
      %v290 = vadd.f32 %v267, %v286
      %v291 = vadd.f32 %v268, %v287
      %v292 = vadd.f32 %v269, %v288
      %v293 = vadd.f32 %v270, %v289
      %vm294 = vcmask 1045504
      %v295 = vsel %vm294, %v292, -inf
      %v296 = vmax.f32 %v290, %v295
      %v297 = vrot.slane %v296, 4
      %v298 = vmax.f32 %v296, %v297
      %v299 = vrot.slane %v298, 2
      %v300 = vmax.f32 %v298, %v299
      %v301 = vrot.slane %v300, 1
      %v302 = vmax.f32 %v300, %v301
      %v303 = vsel %vm294, %v293, -inf
      %v304 = vmax.f32 %v291, %v303
      %v305 = vrot.slane %v304, 4
      %v306 = vmax.f32 %v304, %v305
      %v307 = vrot.slane %v306, 2
      %v308 = vmax.f32 %v306, %v307
      %v309 = vrot.slane %v308, 1
      %v310 = vmax.f32 %v308, %v309
      %v311 = vsub.f32 %v290, %v302
      %v312 = vsub.f32 %v291, %v310
      %v313 = vsub.f32 %v292, %v302
      %v314 = vsub.f32 %v293, %v310
      %v315 = vmul.f32 %v311, 1.442695
      %v316 = vpow.pop %v315
      %v317 = vmul.f32 %v312, 1.442695
      %v318 = vpow.pop %v317
      %v319 = vmul.f32 %v313, 1.442695
      %v320 = vpow.pop %v319
      %v321 = vmul.f32 %v314, 1.442695
      %v322 = vpow.pop %v321
      %v323 = vsel %vm294, %v320, 0.0
      %v324 = vadd.f32 %v316, %v323
      %v325 = vrot.slane %v324, 4
      %v326 = vadd.f32 %v324, %v325
      %v327 = vrot.slane %v326, 2
      %v328 = vadd.f32 %v326, %v327
      %v329 = vrot.slane %v328, 1
      %v330 = vadd.f32 %v328, %v329
      %v331 = vsel %vm294, %v322, 0.0
      %v332 = vadd.f32 %v318, %v331
      %v333 = vrot.slane %v332, 4
      %v334 = vadd.f32 %v332, %v333
      %v335 = vrot.slane %v334, 2
      %v336 = vadd.f32 %v334, %v335
      %v337 = vrot.slane %v336, 1
      %v338 = vadd.f32 %v336, %v337
      %v339 = vrcp.pop %v330
      %v340 = vmul.f32 %v330, %v339
      %v341 = vsub.f32 1.0, %v340
      %v342 = vmul.f32 %v339, %v341
      %v343 = vadd.f32 %v339, %v342
      %vm344 = vweird.f32 %v330
      %vm345 = vweird.f32 %v339
      %vm346 = vmor %vm344, %vm345
      %v347 = vsel %vm346, %v339, %v343
      %v348 = vand.u32 2147483647, %v330
      %vm349 = vcmp.eq.f32.partialorder %v348, 8.507059e+37
      %v350 = vand.u32 %v330, 2147483648
      %v351 = vor.u32 1.1754944e-38, %v350
      %v352 = vsel %vm349, %v351, %v347
      %v353 = vrcp.pop %v338
      %v354 = vmul.f32 %v338, %v353
      %v355 = vsub.f32 1.0, %v354
      %v356 = vmul.f32 %v353, %v355
      %v357 = vadd.f32 %v353, %v356
      %vm358 = vweird.f32 %v338
      %vm359 = vweird.f32 %v353
      %vm360 = vmor %vm358, %vm359
      %v361 = vsel %vm360, %v353, %v357
      %v362 = vand.u32 2147483647, %v338
      %vm363 = vcmp.eq.f32.partialorder %v362, 8.507059e+37
      %v364 = vand.u32 %v338, 2147483648
      %v365 = vor.u32 1.1754944e-38, %v364
      %v366 = vsel %vm363, %v365, %v361
      %v367 = vmul.f32 %v316, %v352
      %v368 = vmul.f32 %v318, %v366
      %v369 = vmul.f32 %v320, %v352
      %v370 = vmul.f32 %v322, %v366
      %371 = vst [vmem:[%s208] sm:$0xff] %v367
      %372 = vst [vmem:[%s208 + $0x8] sm:$0xff] %v368
      %373 = vst [vmem:[%s208 + $0x10] sm:$0x3f] %v369
      %374 = vst [vmem:[%s208 + $0x18] sm:$0x3f] %v370
      %s375 = smul.u32 2, %s19
      %p376 = scmp.lt.s32.totalorder %s18, 1
      %s377 = scalar_select %p376, %s18, 1
      %p378 = scmp.lt.s32.totalorder %s375, 1
      %s379 = scalar_select %p378, %s375, 1
      %s380 = smul.addr %s377, 4
      %s381 = sadd.s32 %s379, %s380
      %s382 = smul.addr %s381, 8
      %s383 = scalar_lea.vmem %s3, %s382
      // Predicated region
      $region33: #{model_forward.1} parent=31 // pred_check
        %p384 = pneg %p116
      $region34: #{model_forward.1} parent=31 // pred_check_branch
        %386 = sbr.rel (%p384) target = $region36
      $region35: #{model_forward.1} parent=31 // pred_region
        %s387 = smul.u32 2, %s19
      $region36: #{model_forward.1} parent=31 // pred_fallthru
        _
    $region32: #{model_forward.1} parent=5 // pred_fallthru
      _
    %p388 = scmp.le.s32.totalorder 2, %s9
    // Predicated region
    $region37: #{model_forward.1} parent=5 // pred_check
      %p389 = pneg %p388
    $region38: #{model_forward.1} parent=5 // pred_check_branch
      %391 = sbr.rel (%p389) target = $region40
    $region39: #{model_forward.1} parent=5 // pred_region
      %s392 = ssub.s32 %s9, 2
      // Predicated region
      $region41: #{model_forward.1} parent=39 // pred_check
        %p393 = pneg %p122
      $region42: #{model_forward.1} parent=39 // pred_check_branch
        %395 = sbr.rel (%p393) target = $region44
      $region43: #{model_forward.1} parent=39 // pred_region
        %s396 = smul.u32 2, %s21
        %p397 = scmp.lt.s32.totalorder %s20, 1
        %s398 = scalar_select %p397, %s20, 1
        %p399 = scmp.lt.s32.totalorder %s396, 1
        %s400 = scalar_select %p399, %s396, 1
        %s401 = smul.addr %s398, 4
        %s402 = sadd.s32 %s400, %s401
        %s403 = smul.addr %s402, 8
        %s404 = scalar_lea.vmem %s3, %s403
      $region44: #{model_forward.1} parent=39 // pred_fallthru
        _
    $region40: #{model_forward.1} parent=5 // pred_fallthru
      _
  $region6: #{model_forward.1} parent=0 // loop_footer
    %s13 = sadd.s32 1, %s9
  $region7: #{model_forward.1} parent=0 // loop_footer_branch
    %8 = sbr.rel target = $region3
  $region8: #{model_forward.1} parent=0 // loop_exit
    _

</llo_original>
